<compile_context>
chip_gen: v7x
topology: tpu7x:2x2x1
jax: 0.10.0
libtpu: 0.0.40
codegen_flags: <defaults>
</compile_context>

<pallas_src>
import functools

import jax
import jax.numpy as jnp
from jax.experimental import pallas as pl
from jax.experimental.pallas import tpu as pltpu

HID = 128  # hidden width of the three Linear layers


def _round_up(x, m):
    return ((x + m - 1) // m) * m


def _use_bf16_epilogue():
    """bf16 bias-add/ReLU only on chips with a bf16-capable VALU (v6e/v7x)."""
    try:
        kind = jax.devices()[0].device_kind.lower()
    except Exception:
        return False
    return not any(v in kind for v in ("v2", "v3", "v4", "v5"))


def _choose_tile(B, tb):
    """Pick (TB, Bp) so TB divides Bp and all blocks are layout-legal.

    Small batches: one grid step (TB == Bp, 8-aligned).
    Large batches: TB is a multiple of 128 (legal lane-dense (2, TB) out block)
    and, when possible, the grid has >=2 steps so the parallel batch axis can
    shard across TensorCores (v7x).
    """
    if B <= min(tb, 256):
        TB = _round_up(max(B, 1), 8)
        return TB, TB
    n_chunks = pl.cdiv(B, 128)                 # 128-row chunks of the batch
    max_chunks_per_tile = max(1, tb // 128)
    chunks_per_tile = min(max_chunks_per_tile, max(1, n_chunks // 2))
    TB = 128 * chunks_per_tile
    Bp = _round_up(B, TB)
    return TB, Bp


def actor_kernel(obs_ref, w1_ref, b1_ref, w2_ref, b2_ref, w3_ref, b3_ref,
                 wh_ref, bh_ref, out_ref, *, bf16_epilogue):
    """One batch tile of the fused MLP.

    obs_ref : (TB, D)    f32  (cast to bf16 in-kernel)
    w1_ref  : (D, 128)   bf16    b1_ref: (1, 128) f32
    w2_ref  : (128, 128) bf16    b2_ref: (1, 128) f32
    w3_ref  : (128, 128) bf16    b3_ref: (1, 128) f32
    wh_ref  : (2, 128)   bf16    bh_ref: (2, 1)   f32   # row0=linear_vel, row1=ang_vel
    out_ref : (2, TB)    f32  (lane-dense: batch on the lane axis)
    """
    x = obs_ref[...].astype(jnp.bfloat16)  # in-kernel f32->bf16 cast (cheap VPU pass)

    def dense_relu(h, w_ref, b_ref):
        z = jnp.dot(h, w_ref[...], preferred_element_type=jnp.float32)
        if bf16_epilogue:
            zb = z.astype(jnp.bfloat16) + b_ref[...].astype(jnp.bfloat16)
            return jnp.maximum(zb, 0.0)
        z = z + b_ref[...]
        return jnp.maximum(z, 0.0).astype(jnp.bfloat16)

    h = dense_relu(x, w1_ref, b1_ref)
    h = dense_relu(h, w2_ref, b2_ref)
    h = dense_relu(h, w3_ref, b3_ref)

    # Head computed directly in (2, TB) layout: contract wh (2,128) with h (TB,128)
    # over the 128-dim (NT matmul on the MXU) -> lane-dense result, no XLU transpose.
    zt = jax.lax.dot_general(
        wh_ref[...], h,
        dimension_numbers=(((1,), (1,)), ((), ())),
        preferred_element_type=jnp.float32,
    ) + bh_ref[...]                                    # (2, TB) f32

    # Single EUP pass: tanh once; sigmoid(z) = 0.5 * (1 + tanh(z / 2)).
    row = jax.lax.broadcasted_iota(jnp.int32, zt.shape, dimension=0)
    is_lin = row == 0
    t = jnp.tanh(jnp.where(is_lin, 0.5 * zt, zt))
    out_ref[...] = jnp.where(is_lin, 0.5 * (t + 1.0), t)


def actor_forward(obs, params, *, tb=512, bf16_epilogue=None):
    """obs: (B, in_dim) float32. Returns (B, 2): [sigmoid(lin_vel), tanh(ang_vel)]."""
    if bf16_epilogue is None:
        bf16_epilogue = _use_bf16_epilogue()

    B, D = obs.shape
    TB, Bp = _choose_tile(B, tb)
    if Bp != B:
        obs = jnp.pad(obs, ((0, Bp - B), (0, 0)))

    weight_args = (
        params["w1"], params["b1"],
        params["w2"], params["b2"],
        params["w3"], params["b3"],
        params["wh_t"], params["bh_t"],
    )

    def const_spec(shape):
        return pl.BlockSpec(shape, lambda i: (0, 0))

    in_specs = [pl.BlockSpec((TB, D), lambda i: (i, 0))] + [
        const_spec(tuple(w.shape)) for w in weight_args
    ]
    out_spec = pl.BlockSpec((2, TB), lambda i: (0, i))

    flops = 2 * Bp * (D * HID + 2 * HID * HID + HID * 2)
    bytes_accessed = (
        Bp * D * 4
        + sum(int(w.size) * w.dtype.itemsize for w in weight_args)
        + 2 * Bp * 4
    )

    out = pl.pallas_call(
        functools.partial(actor_kernel, bf16_epilogue=bf16_epilogue),
        out_shape=jax.ShapeDtypeStruct((2, Bp), jnp.float32),
        grid=(Bp // TB,),
        in_specs=in_specs,
        out_specs=out_spec,
        compiler_params=pltpu.CompilerParams(
            dimension_semantics=("parallel",)),
        cost_estimate=pl.CostEstimate(
            flops=flops,
            transcendentals=2 * Bp,
            bytes_accessed=bytes_accessed),
    )(obs, *weight_args)

    out = out[:, :B] if Bp != B else out
    return out.T  # (B, 2)


def init_params(key, in_dim):
    """Deterministic synthetic init matching the nn.Linear shapes of ActorNetwork."""
    ks = jax.random.split(key, 10)

    def linear(kw, kb, fan_in, fan_out):
        bound = 1.0 / jnp.sqrt(jnp.float32(fan_in))
        w = jax.random.uniform(kw, (fan_in, fan_out), jnp.float32, -bound, bound)
        b = jax.random.uniform(kb, (1, fan_out), jnp.float32, -bound, bound)
        return w, b

    w1, b1 = linear(ks[0], ks[1], in_dim, HID)   # layer1
    w2, b2 = linear(ks[2], ks[3], HID, HID)      # layer2
    w3, b3 = linear(ks[4], ks[5], HID, HID)      # layer3
    wl, bl = linear(ks[6], ks[7], HID, 1)        # linear_vel head
    wa, ba = linear(ks[8], ks[9], HID, 1)        # ang_vel head

    # Fuse the two 1-unit heads, stored pre-transposed for the lane-dense output:
    # wh_t: (2, 128), bh_t: (2, 1)   (row 0 = linear_vel, row 1 = ang_vel).
    wh_t = jnp.concatenate([wl, wa], axis=1).T   # (2, 128)
    bh_t = jnp.concatenate([bl, ba], axis=1).T   # (2, 1)

    return dict(
        w1=w1.astype(jnp.bfloat16), b1=b1,
        w2=w2.astype(jnp.bfloat16), b2=b2,
        w3=w3.astype(jnp.bfloat16), b3=b3,
        wh_t=wh_t.astype(jnp.bfloat16), bh_t=bh_t,
    )


def reference_forward_bf16(obs, params, *, bf16_epilogue):
    """Pure-JAX reference following the kernel's bf16/f32 recipe."""
    def dr(h, w, b):
        z = jnp.dot(h, w, preferred_element_type=jnp.float32)
        if bf16_epilogue:
            z = z.astype(jnp.bfloat16) + b.astype(jnp.bfloat16)
            return jnp.maximum(z, 0.0)
        return jnp.maximum(z + b, 0.0).astype(jnp.bfloat16)

    h = dr(obs.astype(jnp.bfloat16), params["w1"], params["b1"])
    h = dr(h, params["w2"], params["b2"])
    h = dr(h, params["w3"], params["b3"])
    z = jnp.dot(h, params["wh_t"].T, preferred_element_type=jnp.float32) + params["bh_t"].T
    lin = jax.nn.sigmoid(z[:, 0:1])
    ang = jnp.tanh(z[:, 1:2])
    return jnp.concatenate([lin, ang], axis=-1)


def reference_forward_f32(obs, params):
    """Full-precision reference of the same network (weights upcast to f32)."""
    h = jnp.maximum(obs @ params["w1"].astype(jnp.float32) + params["b1"], 0.0)
    h = jnp.maximum(h @ params["w2"].astype(jnp.float32) + params["b2"], 0.0)
    h = jnp.maximum(h @ params["w3"].astype(jnp.float32) + params["b3"], 0.0)
    z = h @ params["wh_t"].astype(jnp.float32).T + params["bh_t"].T
    lin = jax.nn.sigmoid(z[:, 0:1])
    ang = jnp.tanh(z[:, 1:2])
    return jnp.concatenate([lin, ang], axis=-1)


if __name__ == "__main__":
    key = jax.random.PRNGKey(0)
    in_dim = 32
    bf16_ep = _use_bf16_epilogue()

    k_obs, k_params, k_obs2 = jax.random.split(key, 3)
    params = init_params(k_params, in_dim)

    # Case 1: small control-loop batch (single grid step).
    obs = jax.random.normal(k_obs, (8, in_dim), dtype=jnp.float32)
    out = jax.block_until_ready(actor_forward(obs, params))
    assert out.shape == (8, 2), out.shape
    ref_bf = reference_forward_bf16(obs, params, bf16_epilogue=bf16_ep)
    ref_f32 = reference_forward_f32(obs, params)
    assert jnp.allclose(out, ref_bf, atol=2e-2, rtol=2e-2), (out, ref_bf)
    assert jnp.allclose(out, ref_f32, atol=5e-2, rtol=5e-2), (out, ref_f32)

    # Case 2: throughput batch (multi-step grid, lane-dense 128-multiple tiles,
    # batch padding exercised).
    obs2 = jax.random.normal(k_obs2, (300, in_dim), dtype=jnp.float32)
    out2 = jax.block_until_ready(actor_forward(obs2, params))
    assert out2.shape == (300, 2), out2.shape
    ref2_bf = reference_forward_bf16(obs2, params, bf16_epilogue=bf16_ep)
    ref2_f32 = reference_forward_f32(obs2, params)
    assert jnp.allclose(out2, ref2_bf, atol=2e-2, rtol=2e-2), (out2, ref2_bf)
    assert jnp.allclose(out2, ref2_f32, atol=5e-2, rtol=5e-2), (out2, ref2_f32)

    print("KERNEL_OK")
</pallas_src>

<mosaic_0001>
module attributes {stable_mosaic.version = 11 : i64} {
  func.func @actor_kernel(%arg0: i32, %arg1: memref<8x32xf32, #tpu.memory_space<vmem>>, %arg2: memref<32x128xbf16, #tpu.memory_space<vmem>>, %arg3: memref<1x128xf32, #tpu.memory_space<vmem>>, %arg4: memref<128x128xbf16, #tpu.memory_space<vmem>>, %arg5: memref<1x128xf32, #tpu.memory_space<vmem>>, %arg6: memref<128x128xbf16, #tpu.memory_space<vmem>>, %arg7: memref<1x128xf32, #tpu.memory_space<vmem>>, %arg8: memref<2x128xbf16, #tpu.memory_space<vmem>>, %arg9: memref<2x1xf32, #tpu.memory_space<vmem>>, %arg10: memref<2x8xf32, #tpu.memory_space<vmem>>) attributes {dimension_semantics = [#tpu.dimension_semantics<parallel>], iteration_bounds = array<i64: 1>, scalar_prefetch = 0 : i64, scratch_operands = 0 : i64, tpu.core_type = #tpu.core_type<tc>, window_params = [{transform_indices = @transform_0, window_bounds = array<i64: 8, 32>}, {pipeline_mode = #tpu.pipeline_mode<synchronous>, transform_indices = @transform_1, window_bounds = array<i64: 32, 128>}, {pipeline_mode = #tpu.pipeline_mode<synchronous>, transform_indices = @transform_2, window_bounds = array<i64: 1, 128>}, {pipeline_mode = #tpu.pipeline_mode<synchronous>, transform_indices = @transform_3, window_bounds = array<i64: 128, 128>}, {pipeline_mode = #tpu.pipeline_mode<synchronous>, transform_indices = @transform_4, window_bounds = array<i64: 1, 128>}, {pipeline_mode = #tpu.pipeline_mode<synchronous>, transform_indices = @transform_5, window_bounds = array<i64: 128, 128>}, {pipeline_mode = #tpu.pipeline_mode<synchronous>, transform_indices = @transform_6, window_bounds = array<i64: 1, 128>}, {pipeline_mode = #tpu.pipeline_mode<synchronous>, transform_indices = @transform_7, window_bounds = array<i64: 2, 128>}, {pipeline_mode = #tpu.pipeline_mode<synchronous>, transform_indices = @transform_8, window_bounds = array<i64: 2, 1>}, {transform_indices = @transform_9, window_bounds = array<i64: 2, 8>}]} {
    %c0 = arith.constant 0 : index
    %c0_0 = arith.constant 0 : index
    %0 = vector.load %arg1[%c0, %c0_0] : memref<8x32xf32, #tpu.memory_space<vmem>>, vector<8x32xf32>
    %1 = arith.truncf %0 : vector<8x32xf32> to vector<8x32xbf16>
    %c0_1 = arith.constant 0 : index
    %c0_2 = arith.constant 0 : index
    %2 = vector.load %arg2[%c0_1, %c0_2] : memref<32x128xbf16, #tpu.memory_space<vmem>>, vector<32x128xbf16>
    %cst = arith.constant dense<0.000000e+00> : vector<8x128xf32>
    %3 = tpu.matmul %1, %2, %cst {dimension_numbers = #tpu.dot_dimension_numbers<[1], [0], [0], [1], [0, 0, 1, 1], [], []>} : vector<8x32xbf16>, vector<32x128xbf16>, vector<8x128xf32> -> vector<8x128xf32>
    %4 = arith.truncf %3 : vector<8x128xf32> to vector<8x128xbf16>
    %c0_3 = arith.constant 0 : index
    %c0_4 = arith.constant 0 : index
    %5 = vector.load %arg3[%c0_3, %c0_4] : memref<1x128xf32, #tpu.memory_space<vmem>>, vector<1x128xf32>
    %6 = arith.truncf %5 : vector<1x128xf32> to vector<1x128xbf16>
    %7 = vector.broadcast %6 : vector<1x128xbf16> to vector<8x128xbf16>
    %8 = arith.addf %4, %7 : vector<8x128xbf16>
    %cst_5 = arith.constant 0.000000e+00 : bf16
    %9 = vector.broadcast %cst_5 : bf16 to vector<8x128xbf16>
    %10 = arith.maximumf %8, %9 : vector<8x128xbf16>
    %c0_6 = arith.constant 0 : index
    %c0_7 = arith.constant 0 : index
    %11 = vector.load %arg4[%c0_6, %c0_7] : memref<128x128xbf16, #tpu.memory_space<vmem>>, vector<128x128xbf16>
    %cst_8 = arith.constant dense<0.000000e+00> : vector<8x128xf32>
    %12 = tpu.matmul %10, %11, %cst_8 {dimension_numbers = #tpu.dot_dimension_numbers<[1], [0], [0], [1], [0, 0, 1, 1], [], []>} : vector<8x128xbf16>, vector<128x128xbf16>, vector<8x128xf32> -> vector<8x128xf32>
    %13 = arith.truncf %12 : vector<8x128xf32> to vector<8x128xbf16>
    %c0_9 = arith.constant 0 : index
    %c0_10 = arith.constant 0 : index
    %14 = vector.load %arg5[%c0_9, %c0_10] : memref<1x128xf32, #tpu.memory_space<vmem>>, vector<1x128xf32>
    %15 = arith.truncf %14 : vector<1x128xf32> to vector<1x128xbf16>
    %16 = vector.broadcast %15 : vector<1x128xbf16> to vector<8x128xbf16>
    %17 = arith.addf %13, %16 : vector<8x128xbf16>
    %cst_11 = arith.constant 0.000000e+00 : bf16
    %18 = vector.broadcast %cst_11 : bf16 to vector<8x128xbf16>
    %19 = arith.maximumf %17, %18 : vector<8x128xbf16>
    %c0_12 = arith.constant 0 : index
    %c0_13 = arith.constant 0 : index
    %20 = vector.load %arg6[%c0_12, %c0_13] : memref<128x128xbf16, #tpu.memory_space<vmem>>, vector<128x128xbf16>
    %cst_14 = arith.constant dense<0.000000e+00> : vector<8x128xf32>
    %21 = tpu.matmul %19, %20, %cst_14 {dimension_numbers = #tpu.dot_dimension_numbers<[1], [0], [0], [1], [0, 0, 1, 1], [], []>} : vector<8x128xbf16>, vector<128x128xbf16>, vector<8x128xf32> -> vector<8x128xf32>
    %22 = arith.truncf %21 : vector<8x128xf32> to vector<8x128xbf16>
    %c0_15 = arith.constant 0 : index
    %c0_16 = arith.constant 0 : index
    %23 = vector.load %arg7[%c0_15, %c0_16] : memref<1x128xf32, #tpu.memory_space<vmem>>, vector<1x128xf32>
    %24 = arith.truncf %23 : vector<1x128xf32> to vector<1x128xbf16>
    %25 = vector.broadcast %24 : vector<1x128xbf16> to vector<8x128xbf16>
    %26 = arith.addf %22, %25 : vector<8x128xbf16>
    %cst_17 = arith.constant 0.000000e+00 : bf16
    %27 = vector.broadcast %cst_17 : bf16 to vector<8x128xbf16>
    %28 = arith.maximumf %26, %27 : vector<8x128xbf16>
    %c0_18 = arith.constant 0 : index
    %c0_19 = arith.constant 0 : index
    %29 = vector.load %arg8[%c0_18, %c0_19] : memref<2x128xbf16, #tpu.memory_space<vmem>>, vector<2x128xbf16>
    %cst_20 = arith.constant dense<0.000000e+00> : vector<2x8xf32>
    %30 = tpu.matmul %29, %28, %cst_20 {dimension_numbers = #tpu.dot_dimension_numbers<[1], [1], [0], [0], [0, 0, 1, 0], [], []>} : vector<2x128xbf16>, vector<8x128xbf16>, vector<2x8xf32> -> vector<2x8xf32>
    %c0_21 = arith.constant 0 : index
    %c0_22 = arith.constant 0 : index
    %31 = vector.load %arg9[%c0_21, %c0_22] : memref<2x1xf32, #tpu.memory_space<vmem>>, vector<2x1xf32>
    %32 = vector.broadcast %31 : vector<2x1xf32> to vector<2x8xf32>
    %33 = arith.addf %30, %32 : vector<2x8xf32>
    %34 = tpu.iota {dimensions = array<i32: 0>} : vector<2x8xi32>
    %c0_i32 = arith.constant 0 : i32
    %35 = vector.broadcast %c0_i32 : i32 to vector<2x8xi32>
    %36 = arith.cmpi eq, %34, %35 : vector<2x8xi32>
    %cst_23 = arith.constant 5.000000e-01 : f32
    %37 = vector.broadcast %cst_23 : f32 to vector<2x8xf32>
    %38 = arith.mulf %37, %33 : vector<2x8xf32>
    %39 = arith.select %36, %38, %33 : vector<2x8xi1>, vector<2x8xf32>
    %40 = math.tanh %39 : vector<2x8xf32>
    %cst_24 = arith.constant 1.000000e+00 : f32
    %41 = vector.broadcast %cst_24 : f32 to vector<2x8xf32>
    %42 = arith.addf %40, %41 : vector<2x8xf32>
    %cst_25 = arith.constant 5.000000e-01 : f32
    %43 = vector.broadcast %cst_25 : f32 to vector<2x8xf32>
    %44 = arith.mulf %43, %42 : vector<2x8xf32>
    %45 = arith.select %36, %44, %40 : vector<2x8xi1>, vector<2x8xf32>
    %c0_26 = arith.constant 0 : index
    %c0_27 = arith.constant 0 : index
    %46 = vector.load %arg10[%c0_26, %c0_27] : memref<2x8xf32, #tpu.memory_space<vmem>>, vector<2x8xf32>
    tpu.vector_store %arg10[%c0_26, %c0_27], %45 {strides = array<i32>} : memref<2x8xf32, #tpu.memory_space<vmem>>, vector<2x8xf32>,
    return
  }
  func.func @transform_0(%arg0: i32) -> (i32, i32) {
    %c0_i32 = arith.constant 0 : i32
    %c0_i32_0 = arith.constant 0 : i32
    return %arg0, %c0_i32 : i32, i32
  }
  func.func @transform_1(%arg0: i32) -> (i32, i32) {
    %c0_i32 = arith.constant 0 : i32
    %c0_i32_0 = arith.constant 0 : i32
    %c0_i32_1 = arith.constant 0 : i32
    return %c0_i32, %c0_i32_0 : i32, i32
  }
  func.func @transform_2(%arg0: i32) -> (i32, i32) {
    %c0_i32 = arith.constant 0 : i32
    %c0_i32_0 = arith.constant 0 : i32
    %c0_i32_1 = arith.constant 0 : i32
    return %c0_i32, %c0_i32_0 : i32, i32
  }
  func.func @transform_3(%arg0: i32) -> (i32, i32) {
    %c0_i32 = arith.constant 0 : i32
    %c0_i32_0 = arith.constant 0 : i32
    %c0_i32_1 = arith.constant 0 : i32
    return %c0_i32, %c0_i32_0 : i32, i32
  }
  func.func @transform_4(%arg0: i32) -> (i32, i32) {
    %c0_i32 = arith.constant 0 : i32
    %c0_i32_0 = arith.constant 0 : i32
    %c0_i32_1 = arith.constant 0 : i32
    return %c0_i32, %c0_i32_0 : i32, i32
  }
  func.func @transform_5(%arg0: i32) -> (i32, i32) {
    %c0_i32 = arith.constant 0 : i32
    %c0_i32_0 = arith.constant 0 : i32
    %c0_i32_1 = arith.constant 0 : i32
    return %c0_i32, %c0_i32_0 : i32, i32
  }
  func.func @transform_6(%arg0: i32) -> (i32, i32) {
    %c0_i32 = arith.constant 0 : i32
    %c0_i32_0 = arith.constant 0 : i32
    %c0_i32_1 = arith.constant 0 : i32
    return %c0_i32, %c0_i32_0 : i32, i32
  }
  func.func @transform_7(%arg0: i32) -> (i32, i32) {
    %c0_i32 = arith.constant 0 : i32
    %c0_i32_0 = arith.constant 0 : i32
    %c0_i32_1 = arith.constant 0 : i32
    return %c0_i32, %c0_i32_0 : i32, i32
  }
  func.func @transform_8(%arg0: i32) -> (i32, i32) {
    %c0_i32 = arith.constant 0 : i32
    %c0_i32_0 = arith.constant 0 : i32
    %c0_i32_1 = arith.constant 0 : i32
    return %c0_i32, %c0_i32_0 : i32, i32
  }
  func.func @transform_9(%arg0: i32) -> (i32, i32) {
    %c0_i32 = arith.constant 0 : i32
    %c0_i32_0 = arith.constant 0 : i32
    return %c0_i32, %arg0 : i32, i32
  }
}

</mosaic_0001>

<llo_original>
// kernel: tpu_custom_call.1
$region0: #{tpu_custom_call.1}
  #allocation0 [shape = 'u32[]', space=smem, size = 0x4, offset = 0x4, fixed_abs, tag = 'smem constant byte address 0x4 - core index']
  #allocation1 [shape = 'u32[144,128]{1,0:T(1,128)}', space=vmem, size = 0x12000, scoped, tag = 'internal scratch']
  %s0 = inlined_call_operand.hbm [shape: f32[8,32], index: 0, kind: input, shape index: {}]
  %s1 = inlined_call_operand.hbm [shape: bf16[32,128], index: 1, kind: input, shape index: {}]
  %s2 = inlined_call_operand.vmem [shape: f32[1,128], index: 2, kind: input, shape index: {}]
  %s3 = inlined_call_operand.hbm [shape: bf16[128,128], index: 3, kind: input, shape index: {}]
  %s4 = inlined_call_operand.vmem [shape: f32[1,128], index: 4, kind: input, shape index: {}]
  %s5 = inlined_call_operand.hbm [shape: bf16[128,128], index: 5, kind: input, shape index: {}]
  %s6 = inlined_call_operand.vmem [shape: f32[1,128], index: 6, kind: input, shape index: {}]
  %s7 = inlined_call_operand.vmem [shape: bf16[2,128], index: 7, kind: input, shape index: {}]
  %s8 = inlined_call_operand.vmem [shape: f32[2,1], index: 8, kind: input, shape index: {}]
  %s9 = inlined_call_operand.hbm [shape: f32[2,8], index: 9, kind: output, shape index: {}]
  %s10 = sld [smem:[#allocation0]]
  $region62: #{tpu_custom_call.1} parent=0
    _
  %s12 = ssub.s32 1, %s10
  %s13 = scalar_select 0, %s12, %s10
  $region1: #{tpu_custom_call.1} parent=0
    #allocation2 [shape = 'u8[4096]{0}', space=vmem, size = 0x1000, scoped, tag = 'input window, operand 0, single buffered']
    #allocation3 [shape = 's32[1]{0}', space=sflag, size = 0x4, scoped, tag = 'scoped memory for tpu_custom_call.1']
    #allocation4 [shape = 's32[1]{0}', space=sflag, size = 0x4, scoped, tag = 'scoped memory for tpu_custom_call.1']
    #allocation5 [shape = 'u8[8192]{0}', space=vmem, size = 0x2000, scoped, tag = 'input window, operand 1, single buffered']
    #allocation6 [shape = 's32[1]{0}', space=sflag, size = 0x4, scoped, tag = 'scoped memory for tpu_custom_call.1']
    #allocation7 [shape = 'u8[32768]{0}', space=vmem, size = 0x8000, scoped, tag = 'input window, operand 3, single buffered']
    #allocation8 [shape = 'u8[32768]{0}', space=vmem, size = 0x8000, scoped, tag = 'input window, operand 5, single buffered']
    #allocation9 [shape = 's32[1]{0}', space=sflag, size = 0x4, scoped, tag = 'scoped memory for tpu_custom_call.1']
    #allocation10 [shape = 'u8[1024]{0}', space=vmem, size = 0x400, scoped, tag = 'output window, operand 0, single buffered']
    %14 = vsyncpa [#allocation3], 0
    %15 = vsyncpa [#allocation6], 0
    %16 = vsyncpa [#allocation9], 0
    %17 = vsyncpa [#allocation4], 0
    // Predicated region
    $region2: #{tpu_custom_call.1} parent=1 // pred_check
      _
    $region3: #{tpu_custom_call.1} parent=1 // pred_check_branch
      %19 = sbr.rel (0) target = $region5
    $region4: #{tpu_custom_call.1} parent=1 // pred_region
      %s21 = ssub.s32 128, 128
      %22 = vsyncadd [#allocation3], %s21
      %s24 = sshll.u32 [#allocation2], 4
      %s25 = int_to_ptr.vmem [resolvable:$true] %s24
      %27 = dma.hbm_to_vmem [thread:$0]  %s0, 128, %s25, [#allocation3]
    $region5: #{tpu_custom_call.1} parent=1 // pred_fallthru
      _
    // Predicated region
    $region6: #{tpu_custom_call.1} parent=1 // pred_check
      _
    $region7: #{tpu_custom_call.1} parent=1 // pred_check_branch
      %29 = sbr.rel (0) target = $region9
    $region8: #{tpu_custom_call.1} parent=1 // pred_region
      %s31 = ssub.s32 256, 256
      %32 = vsyncadd [#allocation6], %s31
      %s33 = sshll.u32 [#allocation5], 4
      %s34 = int_to_ptr.vmem [resolvable:$true] %s33
      %39 = dma.hbm_to_vmem [thread:$0]  %s1, 256, %s34, [#allocation6], 64, 64, 4
    $region9: #{tpu_custom_call.1} parent=1 // pred_fallthru
      _
    // Predicated region
    $region10: #{tpu_custom_call.1} parent=1 // pred_check
      _
    $region11: #{tpu_custom_call.1} parent=1 // pred_check_branch
      %41 = sbr.rel (0) target = $region13
    $region12: #{tpu_custom_call.1} parent=1 // pred_region
      _
    $region13: #{tpu_custom_call.1} parent=1 // pred_fallthru
      _
    // Predicated region
    $region14: #{tpu_custom_call.1} parent=1 // pred_check
      _
    $region15: #{tpu_custom_call.1} parent=1 // pred_check_branch
      %43 = sbr.rel (0) target = $region17
    $region16: #{tpu_custom_call.1} parent=1 // pred_region
      %s45 = ssub.s32 1024, 1024
      %46 = vsyncadd [#allocation6], %s45
      %s47 = sshll.u32 [#allocation7], 4
      %s48 = int_to_ptr.vmem [resolvable:$true] %s47
      %53 = dma.hbm_to_vmem [thread:$0]  %s3, 1024, %s48, [#allocation6], 64, 64, 4
    $region17: #{tpu_custom_call.1} parent=1 // pred_fallthru
      _
    // Predicated region
    $region18: #{tpu_custom_call.1} parent=1 // pred_check
      _
    $region19: #{tpu_custom_call.1} parent=1 // pred_check_branch
      %55 = sbr.rel (0) target = $region21
    $region20: #{tpu_custom_call.1} parent=1 // pred_region
      _
    $region21: #{tpu_custom_call.1} parent=1 // pred_fallthru
      _
    // Predicated region
    $region22: #{tpu_custom_call.1} parent=1 // pred_check
      _
    $region23: #{tpu_custom_call.1} parent=1 // pred_check_branch
      %57 = sbr.rel (0) target = $region25
    $region24: #{tpu_custom_call.1} parent=1 // pred_region
      %s59 = ssub.s32 1024, 1024
      %60 = vsyncadd [#allocation9], %s59
      %s61 = sshll.u32 [#allocation8], 4
      %s62 = int_to_ptr.vmem [resolvable:$true] %s61
      %67 = dma.hbm_to_vmem [thread:$0]  %s5, 1024, %s62, [#allocation9], 64, 64, 4
    $region25: #{tpu_custom_call.1} parent=1 // pred_fallthru
      _
    // Predicated region
    $region26: #{tpu_custom_call.1} parent=1 // pred_check
      _
    $region27: #{tpu_custom_call.1} parent=1 // pred_check_branch
      %69 = sbr.rel (0) target = $region29
    $region28: #{tpu_custom_call.1} parent=1 // pred_region
      _
    $region29: #{tpu_custom_call.1} parent=1 // pred_fallthru
      _
    // Predicated region
    $region30: #{tpu_custom_call.1} parent=1 // pred_check
      _
    $region31: #{tpu_custom_call.1} parent=1 // pred_check_branch
      %71 = sbr.rel (0) target = $region33
    $region32: #{tpu_custom_call.1} parent=1 // pred_region
      _
    $region33: #{tpu_custom_call.1} parent=1 // pred_fallthru
      _
    // Predicated region
    $region34: #{tpu_custom_call.1} parent=1 // pred_check
      _
    $region35: #{tpu_custom_call.1} parent=1 // pred_check_branch
      %73 = sbr.rel (0) target = $region37
    $region36: #{tpu_custom_call.1} parent=1 // pred_region
      _
    $region37: #{tpu_custom_call.1} parent=1 // pred_fallthru
      _
    // Predicated region
    $region38: #{tpu_custom_call.1} parent=1 // pred_check
      _
    $region39: #{tpu_custom_call.1} parent=1 // pred_check_branch
      %75 = sbr.rel (0) target = $region41
    $region40: #{tpu_custom_call.1} parent=1 // pred_region
      %76 = dma.done [#allocation3], 128
    $region41: #{tpu_custom_call.1} parent=1 // pred_fallthru
      _
    // Predicated region
    $region42: #{tpu_custom_call.1} parent=1 // pred_check
      _
    $region43: #{tpu_custom_call.1} parent=1 // pred_check_branch
      %78 = sbr.rel (0) target = $region45
    $region44: #{tpu_custom_call.1} parent=1 // pred_region
      %79 = dma.done [#allocation6], 256
    $region45: #{tpu_custom_call.1} parent=1 // pred_fallthru
      _
    // Predicated region
    $region46: #{tpu_custom_call.1} parent=1 // pred_check
      _
    $region47: #{tpu_custom_call.1} parent=1 // pred_check_branch
      %81 = sbr.rel (0) target = $region49
    $region48: #{tpu_custom_call.1} parent=1 // pred_region
      %82 = dma.done [#allocation6], 1024
    $region49: #{tpu_custom_call.1} parent=1 // pred_fallthru
      _
    // Predicated region
    $region50: #{tpu_custom_call.1} parent=1 // pred_check
      _
    $region51: #{tpu_custom_call.1} parent=1 // pred_check_branch
      %84 = sbr.rel (0) target = $region53
    $region52: #{tpu_custom_call.1} parent=1 // pred_region
      %85 = dma.done [#allocation9], 1024
    $region53: #{tpu_custom_call.1} parent=1 // pred_fallthru
      _
    %v87 = vld [vmem:[#allocation2] sm:$0xff]
    %v88 = vpack.c.bf16 %v87, %v87
    %v89 = vld [vmem:[#allocation5] sm:$0xf]
    %v90 = vld [vmem:[#allocation5 + $0x4] sm:$0xf]
    %v91 = vld [vmem:[#allocation5 + $0x8] sm:$0xf]
    %v92 = vld [vmem:[#allocation5 + $0xc] sm:$0xf]
    %v97 = vunpack.c.l.b16 %v89
    %v98 = vunpack.c.l.b16 %v90
    %v99 = vunpack.c.l.b16 %v91
    %v100 = vunpack.c.l.b16 %v92
    %v101 = vpack.c.b16 %v98, %v97
    %v102 = vpack.c.b16 %v100, %v99
    %vm105 = vcmask 261120
    %v107 = vsel %vm105, %v88, 0
    %109 = vmatprep.subr.bf16.mxu0 0
    %110 = vmatpush1.bf16.msra.mxu0 %v101
    %111 = vmatprep.subr.bf16.mxu0 0
    %112 = vmatpush1.bf16.msra.mxu0 %v102
    %113 = vmatprep.subr.bf16.mxu0 0
    %114 = vmatpush1.bf16.msra.mxu0 0
    %115 = vmatprep.subr.bf16.mxu0 0
    %116 = vmatpush1.bf16.msra.mxu0 0
    %117 = vmatprep.subr.bf16.mxu0 0
    %118 = vmatpush1.bf16.msra.mxu0 0
    %119 = vmatprep.subr.bf16.mxu0 0
    %120 = vmatpush1.bf16.msra.mxu0 0
    %121 = vmatprep.subr.bf16.mxu0 0
    %122 = vmatpush1.bf16.msra.mxu0 0
    %123 = vmatprep.subr.bf16.mxu0 0
    %124 = vmatpush1.bf16.msra.mxu0 0
    %125 = vmatprep.subr.bf16.mxu0 0
    %126 = vmatpush1.bf16.msra.mxu0 0
    %127 = vmatprep.subr.bf16.mxu0 0
    %128 = vmatpush1.bf16.msra.mxu0 0
    %129 = vmatprep.subr.bf16.mxu0 0
    %130 = vmatpush1.bf16.msra.mxu0 0
    %131 = vmatprep.subr.bf16.mxu0 0
    %132 = vmatpush1.bf16.msra.mxu0 0
    %133 = vmatprep.subr.bf16.mxu0 0
    %134 = vmatpush1.bf16.msra.mxu0 0
    %135 = vmatprep.subr.bf16.mxu0 0
    %136 = vmatpush1.bf16.msra.mxu0 0
    %137 = vmatprep.subr.bf16.mxu0 0
    %138 = vmatpush1.bf16.msra.mxu0 0
    %139 = vmatprep.subr.bf16.mxu0 0
    %140 = vmatpush1.bf16.msra.mxu0 0
    %141 = vmatprep.mubr.bf16.mxu0 0
    %142 = vmatmul.mubr.bf16.gmra.mrb[0].mxu0 %v107
    %v143 = vpop.f32.mrb[0].mxu0
    %v144 = vadd.f32 0.0, %v143
    %v145 = vpop.f32.mrb[0].mxu0
    %v146 = vpop.f32.mrb[0].mxu0
    %v147 = vpop.f32.mrb[0].mxu0
    %148 = vdwg.mxu0
    %v149 = vpack.c.bf16 %v144, %v144
    %v150 = vld [vmem:[%s2] sm:$0x1]
    %v151 = vpack.c.bf16 %v150, %v150
    %v153 = vpack.i.b16 %v151, %v151
    %v155 = vlaneseq
    %v156 = vshrl.u32 %v155, 7
    %v157 = vsub.s32 0, %v156
    %v158 = vrot.slane %v153, %v157
    %v159 = vadd.bf16 %v149, %v158
    %v160 = vmax.bf16 %v159, 0
    %v161 = vld [vmem:[#allocation7] sm:$0xf]
    %v162 = vld [vmem:[#allocation7 + $0x4] sm:$0xf]
    %v163 = vld [vmem:[#allocation7 + $0x8] sm:$0xf]
    %v164 = vld [vmem:[#allocation7 + $0xc] sm:$0xf]
    %v165 = vld [vmem:[#allocation7 + $0x10] sm:$0xf]
    %v166 = vld [vmem:[#allocation7 + $0x14] sm:$0xf]
    %v167 = vld [vmem:[#allocation7 + $0x18] sm:$0xf]
    %v168 = vld [vmem:[#allocation7 + $0x1c] sm:$0xf]
    %v169 = vld [vmem:[#allocation7 + $0x20] sm:$0xf]
    %v170 = vld [vmem:[#allocation7 + $0x24] sm:$0xf]
    %v171 = vld [vmem:[#allocation7 + $0x28] sm:$0xf]
    %v172 = vld [vmem:[#allocation7 + $0x2c] sm:$0xf]
    %v173 = vld [vmem:[#allocation7 + $0x30] sm:$0xf]
    %v174 = vld [vmem:[#allocation7 + $0x34] sm:$0xf]
    %v175 = vld [vmem:[#allocation7 + $0x38] sm:$0xf]
    %v176 = vld [vmem:[#allocation7 + $0x3c] sm:$0xf]
    %v193 = vunpack.c.l.b16 %v161
    %v194 = vunpack.c.l.b16 %v162
    %v195 = vunpack.c.l.b16 %v163
    %v196 = vunpack.c.l.b16 %v164
    %v197 = vunpack.c.l.b16 %v165
    %v198 = vunpack.c.l.b16 %v166
    %v199 = vunpack.c.l.b16 %v167
    %v200 = vunpack.c.l.b16 %v168
    %v201 = vunpack.c.l.b16 %v169
    %v202 = vunpack.c.l.b16 %v170
    %v203 = vunpack.c.l.b16 %v171
    %v204 = vunpack.c.l.b16 %v172
    %v205 = vunpack.c.l.b16 %v173
    %v206 = vunpack.c.l.b16 %v174
    %v207 = vunpack.c.l.b16 %v175
    %v208 = vunpack.c.l.b16 %v176
    %v209 = vpack.c.b16 %v194, %v193
    %v210 = vpack.c.b16 %v196, %v195
    %v211 = vpack.c.b16 %v198, %v197
    %v212 = vpack.c.b16 %v200, %v199
    %v213 = vpack.c.b16 %v202, %v201
    %v214 = vpack.c.b16 %v204, %v203
    %v215 = vpack.c.b16 %v206, %v205
    %v216 = vpack.c.b16 %v208, %v207
    %225 = vmatprep.subr.bf16.mxu0 0
    %226 = vmatpush1.bf16.msra.mxu0 %v209
    %227 = vmatprep.subr.bf16.mxu0 0
    %228 = vmatpush1.bf16.msra.mxu0 %v210
    %229 = vmatprep.subr.bf16.mxu0 0
    %230 = vmatpush1.bf16.msra.mxu0 %v211
    %231 = vmatprep.subr.bf16.mxu0 0
    %232 = vmatpush1.bf16.msra.mxu0 %v212
    %233 = vmatprep.subr.bf16.mxu0 0
    %234 = vmatpush1.bf16.msra.mxu0 %v213
    %235 = vmatprep.subr.bf16.mxu0 0
    %236 = vmatpush1.bf16.msra.mxu0 %v214
    %237 = vmatprep.subr.bf16.mxu0 0
    %238 = vmatpush1.bf16.msra.mxu0 %v215
    %239 = vmatprep.subr.bf16.mxu0 0
    %240 = vmatpush1.bf16.msra.mxu0 %v216
    %241 = vmatprep.subr.bf16.mxu0 0
    %242 = vmatpush1.bf16.msra.mxu0 0
    %243 = vmatprep.subr.bf16.mxu0 0
    %244 = vmatpush1.bf16.msra.mxu0 0
    %245 = vmatprep.subr.bf16.mxu0 0
    %246 = vmatpush1.bf16.msra.mxu0 0
    %247 = vmatprep.subr.bf16.mxu0 0
    %248 = vmatpush1.bf16.msra.mxu0 0
    %249 = vmatprep.subr.bf16.mxu0 0
    %250 = vmatpush1.bf16.msra.mxu0 0
    %251 = vmatprep.subr.bf16.mxu0 0
    %252 = vmatpush1.bf16.msra.mxu0 0
    %253 = vmatprep.subr.bf16.mxu0 0
    %254 = vmatpush1.bf16.msra.mxu0 0
    %255 = vmatprep.subr.bf16.mxu0 0
    %256 = vmatpush1.bf16.msra.mxu0 0
    %257 = vmatprep.mubr.bf16.mxu0 0
    %258 = vmatmul.mubr.bf16.gmra.mrb[0].mxu0 %v160
    %v259 = vpop.f32.mrb[0].mxu0
    %v260 = vadd.f32 0.0, %v259
    %v261 = vpop.f32.mrb[0].mxu0
    %v262 = vpop.f32.mrb[0].mxu0
    %v263 = vpop.f32.mrb[0].mxu0
    %264 = vdwg.mxu0
    %v265 = vpack.c.bf16 %v260, %v260
    %v266 = vld [vmem:[%s4] sm:$0x1]
    %v267 = vpack.c.bf16 %v266, %v266
    %v269 = vpack.i.b16 %v267, %v267
    %v271 = vlaneseq
    %v272 = vshrl.u32 %v271, 7
    %v273 = vsub.s32 0, %v272
    %v274 = vrot.slane %v269, %v273
    %v275 = vadd.bf16 %v265, %v274
    %v276 = vmax.bf16 %v275, 0
    %v277 = vld [vmem:[#allocation8] sm:$0xf]
    %v278 = vld [vmem:[#allocation8 + $0x4] sm:$0xf]
    %v279 = vld [vmem:[#allocation8 + $0x8] sm:$0xf]
    %v280 = vld [vmem:[#allocation8 + $0xc] sm:$0xf]
    %v281 = vld [vmem:[#allocation8 + $0x10] sm:$0xf]
    %v282 = vld [vmem:[#allocation8 + $0x14] sm:$0xf]
    %v283 = vld [vmem:[#allocation8 + $0x18] sm:$0xf]
    %v284 = vld [vmem:[#allocation8 + $0x1c] sm:$0xf]
    %v285 = vld [vmem:[#allocation8 + $0x20] sm:$0xf]
    %v286 = vld [vmem:[#allocation8 + $0x24] sm:$0xf]
    %v287 = vld [vmem:[#allocation8 + $0x28] sm:$0xf]
    %v288 = vld [vmem:[#allocation8 + $0x2c] sm:$0xf]
    %v289 = vld [vmem:[#allocation8 + $0x30] sm:$0xf]
    %v290 = vld [vmem:[#allocation8 + $0x34] sm:$0xf]
    %v291 = vld [vmem:[#allocation8 + $0x38] sm:$0xf]
    %v292 = vld [vmem:[#allocation8 + $0x3c] sm:$0xf]
    %v309 = vunpack.c.l.b16 %v277
    %v310 = vunpack.c.l.b16 %v278
    %v311 = vunpack.c.l.b16 %v279
    %v312 = vunpack.c.l.b16 %v280
    %v313 = vunpack.c.l.b16 %v281
    %v314 = vunpack.c.l.b16 %v282
    %v315 = vunpack.c.l.b16 %v283
    %v316 = vunpack.c.l.b16 %v284
    %v317 = vunpack.c.l.b16 %v285
    %v318 = vunpack.c.l.b16 %v286
    %v319 = vunpack.c.l.b16 %v287
    %v320 = vunpack.c.l.b16 %v288
    %v321 = vunpack.c.l.b16 %v289
    %v322 = vunpack.c.l.b16 %v290
    %v323 = vunpack.c.l.b16 %v291
    %v324 = vunpack.c.l.b16 %v292
    %v325 = vpack.c.b16 %v310, %v309
    %v326 = vpack.c.b16 %v312, %v311
    %v327 = vpack.c.b16 %v314, %v313
    %v328 = vpack.c.b16 %v316, %v315
    %v329 = vpack.c.b16 %v318, %v317
    %v330 = vpack.c.b16 %v320, %v319
    %v331 = vpack.c.b16 %v322, %v321
    %v332 = vpack.c.b16 %v324, %v323
    %341 = vmatprep.subr.bf16.mxu0 0
    %342 = vmatpush1.bf16.msra.mxu0 %v325
    %343 = vmatprep.subr.bf16.mxu0 0
    %344 = vmatpush1.bf16.msra.mxu0 %v326
    %345 = vmatprep.subr.bf16.mxu0 0
    %346 = vmatpush1.bf16.msra.mxu0 %v327
    %347 = vmatprep.subr.bf16.mxu0 0
    %348 = vmatpush1.bf16.msra.mxu0 %v328
    %349 = vmatprep.subr.bf16.mxu0 0
    %350 = vmatpush1.bf16.msra.mxu0 %v329
    %351 = vmatprep.subr.bf16.mxu0 0
    %352 = vmatpush1.bf16.msra.mxu0 %v330
    %353 = vmatprep.subr.bf16.mxu0 0
    %354 = vmatpush1.bf16.msra.mxu0 %v331
    %355 = vmatprep.subr.bf16.mxu0 0
    %356 = vmatpush1.bf16.msra.mxu0 %v332
    %357 = vmatprep.subr.bf16.mxu0 0
    %358 = vmatpush1.bf16.msra.mxu0 0
    %359 = vmatprep.subr.bf16.mxu0 0
    %360 = vmatpush1.bf16.msra.mxu0 0
    %361 = vmatprep.subr.bf16.mxu0 0
    %362 = vmatpush1.bf16.msra.mxu0 0
    %363 = vmatprep.subr.bf16.mxu0 0
    %364 = vmatpush1.bf16.msra.mxu0 0
    %365 = vmatprep.subr.bf16.mxu0 0
    %366 = vmatpush1.bf16.msra.mxu0 0
    %367 = vmatprep.subr.bf16.mxu0 0
    %368 = vmatpush1.bf16.msra.mxu0 0
    %369 = vmatprep.subr.bf16.mxu0 0
    %370 = vmatpush1.bf16.msra.mxu0 0
    %371 = vmatprep.subr.bf16.mxu0 0
    %372 = vmatpush1.bf16.msra.mxu0 0
    %373 = vmatprep.mubr.bf16.mxu0 0
    %374 = vmatmul.mubr.bf16.gmra.mrb[0].mxu0 %v276
    %v375 = vpop.f32.mrb[0].mxu0
    %v376 = vadd.f32 0.0, %v375
    %v377 = vpop.f32.mrb[0].mxu0
    %v378 = vpop.f32.mrb[0].mxu0
    %v379 = vpop.f32.mrb[0].mxu0
    %380 = vdwg.mxu0
    %v381 = vpack.c.bf16 %v376, %v376
    %v382 = vld [vmem:[%s6] sm:$0x1]
    %v383 = vpack.c.bf16 %v382, %v382
    %v385 = vpack.i.b16 %v383, %v383
    %v387 = vlaneseq
    %v388 = vshrl.u32 %v387, 7
    %v389 = vsub.s32 0, %v388
    %v390 = vrot.slane %v385, %v389
    %v391 = vadd.bf16 %v381, %v390
    %v392 = vmax.bf16 %v391, 0
    %v393 = vld [vmem:[%s7] sm:$0x1]
    %v394 = vld [vmem:[%s8] sm:$0x3]
    %396 = vset.pattern.permute.xlu0 0
    %397 = vperm.xlu0 %396, %v394
    %v398 = vpop.permute.xlu0 %397
    %400 = vmatprep.subr.bf16.mxu0 0
    %401 = vmatpush1.bf16.xpose.msra.mxu0 %v392
    %402 = vmatprep.subr.bf16.mxu0 0
    %403 = vmatpush1.bf16.xpose.msra.mxu0 0
    %404 = vmatprep.subr.bf16.mxu0 0
    %405 = vmatpush1.bf16.xpose.msra.mxu0 0
    %406 = vmatprep.subr.bf16.mxu0 0
    %407 = vmatpush1.bf16.xpose.msra.mxu0 0
    %408 = vmatprep.subr.bf16.mxu0 0
    %409 = vmatpush1.bf16.xpose.msra.mxu0 0
    %410 = vmatprep.subr.bf16.mxu0 0
    %411 = vmatpush1.bf16.xpose.msra.mxu0 0
    %412 = vmatprep.subr.bf16.mxu0 0
    %413 = vmatpush1.bf16.xpose.msra.mxu0 0
    %414 = vmatprep.subr.bf16.mxu0 0
    %415 = vmatpush1.bf16.xpose.msra.mxu0 0
    %416 = vmatprep.subr.bf16.mxu0 0
    %417 = vmatpush1.bf16.xpose.msra.mxu0 0
    %418 = vmatprep.subr.bf16.mxu0 0
    %419 = vmatpush1.bf16.xpose.msra.mxu0 0
    %420 = vmatprep.subr.bf16.mxu0 0
    %421 = vmatpush1.bf16.xpose.msra.mxu0 0
    %422 = vmatprep.subr.bf16.mxu0 0
    %423 = vmatpush1.bf16.xpose.msra.mxu0 0
    %424 = vmatprep.subr.bf16.mxu0 0
    %425 = vmatpush1.bf16.xpose.msra.mxu0 0
    %426 = vmatprep.subr.bf16.mxu0 0
    %427 = vmatpush1.bf16.xpose.msra.mxu0 0
    %428 = vmatprep.subr.bf16.mxu0 0
    %429 = vmatpush1.bf16.xpose.msra.mxu0 0
    %430 = vmatprep.subr.bf16.mxu0 0
    %431 = vmatpush1.bf16.xpose.msra.mxu0 0
    %432 = vmatprep.mubr.bf16.mxu0 0
    %433 = vmatmul.mubr.bf16.gmra.mrb[0].mxu0 %v393
    %v434 = vpop.f32.mrb[0].mxu0
    %v435 = vadd.f32 %v398, %v434
    %v436 = vpop.f32.mrb[0].mxu0
    %v437 = vpop.f32.mrb[0].mxu0
    %v438 = vpop.f32.mrb[0].mxu0
    %439 = vdwg.mxu0
    %v440 = vlaneseq
    %v441 = vshrl.u32 %v440, 7
    %vm442 = vcmp.eq.s32.totalorder %v441, 0
    %v443 = vmul.f32 %v435, 0.5
    %v444 = vsel %vm442, %v443, %v435
    %v445 = vtanh.pop %v444
    %v446 = vadd.f32 %v445, 1.0
    %v447 = vmul.f32 %v446, 0.5
    %v448 = vsel %vm442, %v447, %v445
    %vm449 = vcmask 58368
    %450 = vst.msk [vmem:[#allocation10] sm:$0x3] %vm449, %v448
    // Predicated region
    $region54: #{tpu_custom_call.1} parent=1 // pred_check
      _
    $region55: #{tpu_custom_call.1} parent=1 // pred_check_branch
      %452 = sbr.rel (0) target = $region57
    $region56: #{tpu_custom_call.1} parent=1 // pred_region
      %s454 = ssub.s32 32, 32
      %455 = vsyncadd [#allocation4], %s454
      %s457 = sshll.u32 [#allocation10], 4
      %s458 = int_to_ptr.vmem [resolvable:$true] %s457
      %460 = dma.vmem_to_hbm [thread:$0]  %s458, 32, %s9, [#allocation4]
    $region57: #{tpu_custom_call.1} parent=1 // pred_fallthru
      _
    // Predicated region
    $region58: #{tpu_custom_call.1} parent=1 // pred_check
      _
    $region59: #{tpu_custom_call.1} parent=1 // pred_check_branch
      %462 = sbr.rel (0) target = $region61
    $region60: #{tpu_custom_call.1} parent=1 // pred_region
      %463 = dma.done [#allocation4], 32
    $region61: #{tpu_custom_call.1} parent=1 // pred_fallthru
      _
    %464 = vsyncpa [#allocation3], 1
    %465 = vsyncpa [#allocation6], 1
    %466 = vsyncpa [#allocation9], 1
    %467 = vsyncpa [#allocation4], 1

</llo_original>
